<compile_context>
chip_gen: v7x
topology: tpu7x:2x2x1
jax: 0.10.0
libtpu: 0.0.40
codegen_flags: <defaults>
</compile_context>

<pallas_src>
import functools

import jax
import jax.numpy as jnp
import numpy as np
from jax import lax
from jax.experimental import pallas as pl
from jax.experimental.pallas import tpu as pltpu

_LANE = 128
_SUBLANE = 8
_VMEM_BUDGET = 24 * 1024 * 1024   # bytes assumed available for tile sizing
_VMEM_LIMIT = 48 * 1024 * 1024    # explicit scoped-VMEM cap (< v7x 64 MiB phys)
_MAX_TILE = 1024                  # ~85% of HBM roofline territory per docs


def _round_up(x, m):
    return ((x + m - 1) // m) * m


def _choose_tile(n, v_pad):
    """Pick the token-tile size from the VMEM budget."""
    table_bytes = v_pad * v_pad * 4
    # VMEM-resident-table approach only targets small/medium vocab (the real
    # bigram use case: char-level vocab, ~32 KiB table). Huge vocab would need
    # the HBM-gather path again.
    assert 2 * table_bytes < _VMEM_BUDGET // 2, (
        "vocab too large for VMEM-resident table")
    budget = _VMEM_BUDGET - 2 * table_bytes
    # Per token row: double-buffered logits output + one-hot temp (+ tiny idx/tgt).
    per_row = (2 + 1) * v_pad * 4 + 32
    tile = min(_MAX_TILE, max(_SUBLANE, budget // per_row))
    tile = max(_SUBLANE, (tile // _SUBLANE) * _SUBLANE)
    n8 = _round_up(n, _SUBLANE)
    if n8 <= tile:
        return n8                  # single grid step, no accumulator logic
    return tile


# ---------------------------------------------------------------------------
# Kernels
# ---------------------------------------------------------------------------

def _logits_kernel(idx_ref, table_ref, logits_ref, *, v_pad):
    """Inference path: embedding lookup via one-hot matmul (MXU)."""
    tile_n = logits_ref.shape[0]
    tok = idx_ref[...]                                        # (tile_n, 1) i32
    col = lax.broadcasted_iota(jnp.int32, (tile_n, v_pad), 1)
    onehot = (col == tok).astype(jnp.float32)                 # (tile_n, v_pad)
    logits_ref[...] = jnp.dot(onehot, table_ref[...],
                              preferred_element_type=jnp.float32)


def _loss_kernel(idx_ref, tgt_ref, table_ref, logits_ref, part_ref,
                 *, n_valid, vocab, v_pad):
    """Training path: lookup + cross-entropy partial sum (fully parallel)."""
    tile_n = logits_ref.shape[0]
    base = pl.program_id(0) * tile_n

    tok = idx_ref[...]                                        # (tile_n, 1) i32
    col = lax.broadcasted_iota(jnp.int32, (tile_n, v_pad), 1)
    onehot = (col == tok).astype(jnp.float32)
    logits = jnp.dot(onehot, table_ref[...],
                     preferred_element_type=jnp.float32)      # (tile_n, v_pad)
    logits_ref[...] = logits

    # Static branch: skip pad-lane masking when vocab is already lane-aligned.
    if vocab == v_pad:
        masked = logits
    else:
        masked = jnp.where(col < vocab, logits, -jnp.inf)

    m = jnp.max(masked, axis=-1, keepdims=True)               # (tile_n, 1)
    lse = m + jnp.log(jnp.sum(jnp.exp(masked - m), axis=-1, keepdims=True))

    tgt = tgt_ref[...]                                        # (tile_n, 1) i32
    tgt_logit = jnp.sum(jnp.where(col == tgt, logits, 0.0),
                        axis=-1, keepdims=True)               # (tile_n, 1)
    nll = lse - tgt_logit

    # Exclude padded rows from the partial sum.
    row = base + lax.broadcasted_iota(jnp.int32, (tile_n, 1), 0)
    nll = jnp.where(row < n_valid, nll, 0.0)

    # Per-tile partial sum into this tile's own (8,128) slab -> no carried
    # accumulator, grid axis can be "parallel" (v7x megacore).
    part_ref[...] = jnp.broadcast_to(jnp.sum(nll), part_ref.shape)


# ---------------------------------------------------------------------------
# pallas_call wrappers
# ---------------------------------------------------------------------------

@functools.partial(jax.jit, static_argnames=("tile_n",))
def _bigram_logits_pallas(idx_pad, table_pad, *, tile_n):
    n_pad = idx_pad.shape[0]
    v_pad = table_pad.shape[1]
    grid = n_pad // tile_n
    kernel = functools.partial(_logits_kernel, v_pad=v_pad)
    return pl.pallas_call(
        kernel,
        out_shape=jax.ShapeDtypeStruct((n_pad, v_pad), jnp.float32),
        grid_spec=pltpu.PrefetchScalarGridSpec(
            num_scalar_prefetch=0,
            grid=(grid,),
            in_specs=[
                pl.BlockSpec((tile_n, 1), lambda i: (i, 0)),       # token ids
                pl.BlockSpec((v_pad, v_pad), lambda i: (0, 0)),    # resident table
            ],
            out_specs=pl.BlockSpec((tile_n, v_pad), lambda i: (i, 0)),
        ),
        compiler_params=pltpu.CompilerParams(
            dimension_semantics=("parallel",),
            vmem_limit_bytes=_VMEM_LIMIT),
    )(idx_pad, table_pad)


@functools.partial(jax.jit, static_argnames=("tile_n", "n_valid", "vocab"))
def _bigram_loss_pallas(idx_pad, tgt_pad, table_pad, *, tile_n, n_valid, vocab):
    n_pad = idx_pad.shape[0]
    v_pad = table_pad.shape[1]
    grid = n_pad // tile_n
    kernel = functools.partial(_loss_kernel, n_valid=n_valid, vocab=vocab,
                               v_pad=v_pad)
    logits, part = pl.pallas_call(
        kernel,
        out_shape=(
            jax.ShapeDtypeStruct((n_pad, v_pad), jnp.float32),
            jax.ShapeDtypeStruct((grid, _SUBLANE, _LANE), jnp.float32),
        ),
        grid_spec=pltpu.PrefetchScalarGridSpec(
            num_scalar_prefetch=0,
            grid=(grid,),
            in_specs=[
                pl.BlockSpec((tile_n, 1), lambda i: (i, 0)),       # token ids
                pl.BlockSpec((tile_n, 1), lambda i: (i, 0)),       # targets
                pl.BlockSpec((v_pad, v_pad), lambda i: (0, 0)),    # resident table
            ],
            out_specs=(
                pl.BlockSpec((tile_n, v_pad), lambda i: (i, 0)),
                pl.BlockSpec((1, _SUBLANE, _LANE), lambda i: (i, 0, 0)),
            ),
        ),
        compiler_params=pltpu.CompilerParams(
            dimension_semantics=("parallel",),                     # no carry
            vmem_limit_bytes=_VMEM_LIMIT),
    )(idx_pad, tgt_pad, table_pad)
    loss = jnp.sum(part[:, 0, 0]) / jnp.float32(n_valid)
    return logits, loss


# ---------------------------------------------------------------------------
# Python-level module mirroring BigramLanguageModel.forward
# ---------------------------------------------------------------------------

def pad_table(table):
    """Pad the (V, V) embedding table to (v_pad, v_pad). Called ONCE at init."""
    v = table.shape[0]
    v_pad = _round_up(v, _LANE)
    return jnp.pad(table.astype(jnp.float32),
                   ((0, v_pad - v), (0, v_pad - v)))


def bigram_forward(idx, table_pad, vocab, targets=None):
    """idx: (B, T) int32; table_pad: pre-padded (v_pad, v_pad) f32.

    Returns (logits, loss) with logits of shape (B, T, V) when targets is None
    and (B*T, V) when targets are given, matching the PyTorch module.
    """
    b, t = idx.shape
    n = b * t
    v_pad = table_pad.shape[1]
    tile_n = _choose_tile(n, v_pad)
    n_pad = _round_up(n, tile_n)

    idx_flat = jnp.pad(idx.reshape(n).astype(jnp.int32),
                       (0, n_pad - n)).reshape(n_pad, 1)

    if targets is None:
        logits = _bigram_logits_pallas(idx_flat, table_pad, tile_n=tile_n)
        return logits[:n, :vocab].reshape(b, t, vocab), None

    tgt_flat = jnp.pad(targets.reshape(n).astype(jnp.int32),
                       (0, n_pad - n)).reshape(n_pad, 1)
    logits, loss = _bigram_loss_pallas(idx_flat, tgt_flat, table_pad,
                                       tile_n=tile_n, n_valid=n, vocab=vocab)
    return logits[:n, :vocab], loss


class BigramLanguageModel:
    """JAX/Pallas port of the PyTorch BigramLanguageModel forward pass."""

    def __init__(self, vocab_size, key):
        self.vocab_size = vocab_size
        # nn.Embedding(vocab_size, vocab_size) weight, deterministic init.
        self.table = jax.random.normal(key, (vocab_size, vocab_size),
                                       jnp.float32)
        self.table_pad = pad_table(self.table)   # padded once, not per forward

    def __call__(self, idx, targets=None):
        return bigram_forward(idx, self.table_pad, self.vocab_size, targets)

    # TODO(synk): generate() uses torch.multinomial in a host-side
    # autoregressive loop; not a kernel op (would wrap bigram_forward with
    # jax.random.categorical in a Python loop).


def _reference(idx, table, targets):
    """Pure-JAX reference for the sanity check."""
    logits = table[idx]                                   # (B, T, V)
    b, t, c = logits.shape
    lf = logits.reshape(b * t, c)
    tf = targets.reshape(b * t)
    lse = jax.scipy.special.logsumexp(lf, axis=-1)
    nll = lse - lf[jnp.arange(b * t), tf]
    return lf, jnp.mean(nll)


if __name__ == "__main__":
    VOCAB_SIZE = 64   # stands in for len(chars)
    B, T = 2, 8

    key = jax.random.PRNGKey(0)
    k_table, k_idx, k_tgt = jax.random.split(key, 3)

    model = BigramLanguageModel(VOCAB_SIZE, k_table)
    idx = jax.random.randint(k_idx, (B, T), 0, VOCAB_SIZE, jnp.int32)
    targets = jax.random.randint(k_tgt, (B, T), 0, VOCAB_SIZE, jnp.int32)

    # With targets: logits (B*T, V) + scalar loss.
    logits, loss = model(idx, targets)
    jax.block_until_ready((logits, loss))

    # Without targets: logits (B, T, V), loss None.
    logits_nt, loss_nt = model(idx, None)
    jax.block_until_ready(logits_nt)
    assert loss_nt is None
    assert logits_nt.shape == (B, T, VOCAB_SIZE)

    # Correctness vs pure-JAX reference.
    ref_logits, ref_loss = _reference(idx, model.table, targets)
    np.testing.assert_allclose(np.asarray(logits), np.asarray(ref_logits),
                               rtol=1e-5, atol=1e-5)
    np.testing.assert_allclose(float(loss), float(ref_loss),
                               rtol=1e-5, atol=1e-5)
    np.testing.assert_allclose(np.asarray(logits_nt),
                               np.asarray(ref_logits).reshape(B, T, VOCAB_SIZE),
                               rtol=1e-5, atol=1e-5)

    # Multi-tile check: grid > 1 exercises the parallel partial-sum loss path.
    B2, T2 = 16, 128     # 2048 tokens -> two 1024-row tiles
    idx2 = jax.random.randint(jax.random.PRNGKey(1), (B2, T2), 0,
                              VOCAB_SIZE, jnp.int32)
    tgt2 = jax.random.randint(jax.random.PRNGKey(2), (B2, T2), 0,
                              VOCAB_SIZE, jnp.int32)
    logits2, loss2 = model(idx2, tgt2)
    jax.block_until_ready((logits2, loss2))
    ref_l2, ref_loss2 = _reference(idx2, model.table, tgt2)
    np.testing.assert_allclose(np.asarray(logits2), np.asarray(ref_l2),
                               rtol=1e-5, atol=1e-5)
    np.testing.assert_allclose(float(loss2), float(ref_loss2),
                               rtol=1e-5, atol=1e-5)

    print("KERNEL_OK")
</pallas_src>

<mosaic_0001>
module attributes {stable_mosaic.version = 11 : i64} {
  func.func @_loss_kernel(%arg0: i32, %arg1: memref<16x1xi32, #tpu.memory_space<vmem>>, %arg2: memref<16x1xi32, #tpu.memory_space<vmem>>, %arg3: memref<128x128xf32, #tpu.memory_space<vmem>>, %arg4: memref<16x128xf32, #tpu.memory_space<vmem>>, %arg5: memref<1x8x128xf32, #tpu.memory_space<vmem>>) attributes {dimension_semantics = [#tpu.dimension_semantics<parallel>], iteration_bounds = array<i64: 1>, scalar_prefetch = 0 : i64, scratch_operands = 0 : i64, tpu.core_type = #tpu.core_type<tc>, window_params = [{transform_indices = @transform_0, window_bounds = array<i64: 16, 1>}, {transform_indices = @transform_1, window_bounds = array<i64: 16, 1>}, {pipeline_mode = #tpu.pipeline_mode<synchronous>, transform_indices = @transform_2, window_bounds = array<i64: 128, 128>}, {transform_indices = @transform_3, window_bounds = array<i64: 16, 128>}, {transform_indices = @transform_4, window_bounds = array<i64: 1, 8, 128>}]} {
    %c16_i32 = arith.constant 16 : i32
    %0 = arith.muli %arg0, %c16_i32 : i32
    %c0 = arith.constant 0 : index
    %c0_0 = arith.constant 0 : index
    %1 = vector.load %arg1[%c0, %c0_0] : memref<16x1xi32, #tpu.memory_space<vmem>>, vector<16x1xi32>
    %2 = tpu.iota {dimensions = array<i32: 1>} : vector<16x128xi32>
    %3 = vector.broadcast %1 : vector<16x1xi32> to vector<16x128xi32>
    %4 = arith.cmpi eq, %2, %3 : vector<16x128xi32>
    %5 = arith.extui %4 : vector<16x128xi1> to vector<16x128xi32>
    %6 = arith.sitofp %5 : vector<16x128xi32> to vector<16x128xf32>
    %c0_1 = arith.constant 0 : index
    %c0_2 = arith.constant 0 : index
    %7 = vector.load %arg3[%c0_1, %c0_2] : memref<128x128xf32, #tpu.memory_space<vmem>>, vector<128x128xf32>
    %cst = arith.constant dense<0.000000e+00> : vector<16x128xf32>
    %8 = tpu.matmul %6, %7, %cst {dimension_numbers = #tpu.dot_dimension_numbers<[1], [0], [0], [1], [0, 0, 1, 1], [], []>} : vector<16x128xf32>, vector<128x128xf32>, vector<16x128xf32> -> vector<16x128xf32>
    %c0_3 = arith.constant 0 : index
    %c0_4 = arith.constant 0 : index
    %9 = vector.load %arg4[%c0_3, %c0_4] : memref<16x128xf32, #tpu.memory_space<vmem>>, vector<16x128xf32>
    tpu.vector_store %arg4[%c0_3, %c0_4], %8 {strides = array<i32>} : memref<16x128xf32, #tpu.memory_space<vmem>>, vector<16x128xf32>,
    %c64_i32 = arith.constant 64 : i32
    %10 = vector.broadcast %c64_i32 : i32 to vector<16x128xi32>
    %11 = arith.cmpi slt, %2, %10 : vector<16x128xi32>
    %cst_5 = arith.constant 0xFF800000 : f32
    %12 = vector.broadcast %cst_5 : f32 to vector<16x128xf32>
    %13 = arith.select %11, %8, %12 : vector<16x128xi1>, vector<16x128xf32>
    %cst_6 = arith.constant dense<0xFF800000> : vector<16xf32>
    %14 = vector.multi_reduction <maximumf>, %13, %cst_6 [1] : vector<16x128xf32> to vector<16xf32>
    %15 = vector.shape_cast %14 : vector<16xf32> to vector<16x1xf32>
    %16 = vector.broadcast %15 : vector<16x1xf32> to vector<16x128xf32>
    %17 = arith.subf %13, %16 : vector<16x128xf32>
    %18 = math.exp %17 : vector<16x128xf32>
    %cst_7 = arith.constant dense<0.000000e+00> : vector<16xf32>
    %19 = vector.multi_reduction <add>, %18, %cst_7 [1] : vector<16x128xf32> to vector<16xf32>
    %20 = vector.shape_cast %19 : vector<16xf32> to vector<16x1xf32>
    %21 = math.log %20 : vector<16x1xf32>
    %22 = arith.addf %15, %21 : vector<16x1xf32>
    %c0_8 = arith.constant 0 : index
    %c0_9 = arith.constant 0 : index
    %23 = vector.load %arg2[%c0_8, %c0_9] : memref<16x1xi32, #tpu.memory_space<vmem>>, vector<16x1xi32>
    %24 = vector.broadcast %23 : vector<16x1xi32> to vector<16x128xi32>
    %25 = arith.cmpi eq, %2, %24 : vector<16x128xi32>
    %cst_10 = arith.constant 0.000000e+00 : f32
    %26 = vector.broadcast %cst_10 : f32 to vector<16x128xf32>
    %27 = arith.select %25, %8, %26 : vector<16x128xi1>, vector<16x128xf32>
    %cst_11 = arith.constant dense<0.000000e+00> : vector<16xf32>
    %28 = vector.multi_reduction <add>, %27, %cst_11 [1] : vector<16x128xf32> to vector<16xf32>
    %29 = vector.shape_cast %28 : vector<16xf32> to vector<16x1xf32>
    %30 = arith.subf %22, %29 : vector<16x1xf32>
    %31 = tpu.iota {dimensions = array<i32: 0>} : vector<16x1xi32>
    %32 = vector.broadcast %0 : i32 to vector<16x1xi32>
    %33 = arith.addi %32, %31 : vector<16x1xi32>
    %c16_i32_12 = arith.constant 16 : i32
    %34 = vector.broadcast %c16_i32_12 : i32 to vector<16x1xi32>
    %35 = arith.cmpi slt, %33, %34 : vector<16x1xi32>
    %cst_13 = arith.constant 0.000000e+00 : f32
    %36 = vector.broadcast %cst_13 : f32 to vector<16x1xf32>
    %37 = arith.select %35, %30, %36 : vector<16x1xi1>, vector<16x1xf32>
    %38 = vector.shape_cast %37 : vector<16x1xf32> to vector<1x16x1xf32>
    %cst_14 = arith.constant dense<0.000000e+00> : vector<1xf32>
    %39 = vector.multi_reduction <add>, %38, %cst_14 [1, 2] : vector<1x16x1xf32> to vector<1xf32>
    %40 = vector.shape_cast %39 : vector<1xf32> to vector<1x1x1xf32>
    %41 = vector.extract %40[0, 0, 0] : f32 from vector<1x1x1xf32>
    %42 = vector.broadcast %41 : f32 to vector<1x8x128xf32>
    %c0_15 = arith.constant 0 : index
    %c0_16 = arith.constant 0 : index
    %c0_17 = arith.constant 0 : index
    %43 = vector.load %arg5[%c0_15, %c0_16, %c0_17] : memref<1x8x128xf32, #tpu.memory_space<vmem>>, vector<1x8x128xf32>
    tpu.vector_store %arg5[%c0_15, %c0_16, %c0_17], %42 {strides = array<i32>} : memref<1x8x128xf32, #tpu.memory_space<vmem>>, vector<1x8x128xf32>,
    return
  }
  func.func @transform_0(%arg0: i32) -> (i32, i32) {
    %c0_i32 = arith.constant 0 : i32
    %c0_i32_0 = arith.constant 0 : i32
    return %arg0, %c0_i32 : i32, i32
  }
  func.func @transform_1(%arg0: i32) -> (i32, i32) {
    %c0_i32 = arith.constant 0 : i32
    %c0_i32_0 = arith.constant 0 : i32
    return %arg0, %c0_i32 : i32, i32
  }
  func.func @transform_2(%arg0: i32) -> (i32, i32) {
    %c0_i32 = arith.constant 0 : i32
    %c0_i32_0 = arith.constant 0 : i32
    %c0_i32_1 = arith.constant 0 : i32
    return %c0_i32, %c0_i32_0 : i32, i32
  }
  func.func @transform_3(%arg0: i32) -> (i32, i32) {
    %c0_i32 = arith.constant 0 : i32
    %c0_i32_0 = arith.constant 0 : i32
    return %arg0, %c0_i32 : i32, i32
  }
  func.func @transform_4(%arg0: i32) -> (i32, i32, i32) {
    %c0_i32 = arith.constant 0 : i32
    %c0_i32_0 = arith.constant 0 : i32
    %c0_i32_1 = arith.constant 0 : i32
    return %arg0, %c0_i32, %c0_i32_0 : i32, i32, i32
  }
}

</mosaic_0001>

<llo_original>
// kernel: _bigram_loss_pallas.1
$region0: #{_bigram_loss_pallas.1}
  #allocation0 [shape = 'u32[]', space=smem, size = 0x4, offset = 0x4, fixed_abs, tag = 'smem constant byte address 0x4 - core index']
  #allocation1 [shape = 'u32[144,128]{1,0:T(1,128)}', space=vmem, size = 0x12000, scoped, tag = 'internal scratch']
  %s0 = inlined_call_operand.vmem [shape: s32[16,1], index: 0, kind: input, shape index: {}]
  %s1 = inlined_call_operand.vmem [shape: s32[16,1], index: 1, kind: input, shape index: {}]
  %s2 = inlined_call_operand.hbm [shape: f32[128,128], index: 2, kind: input, shape index: {}]
  %s3 = inlined_call_operand.hbm [shape: f32[16,128], index: 3, kind: output, shape index: {0}]
  %s4 = inlined_call_operand.vmem [shape: f32[1,8,128], index: 4, kind: output, shape index: {1}]
  %5 = xla_tuple %s3, %s4
  %s6 = sld [smem:[#allocation0]]
  $region34: #{_bigram_loss_pallas.1} parent=0
    _
  %s8 = ssub.s32 1, %s6
  %s9 = scalar_select 0, %s8, %s6
  $region1: #{_bigram_loss_pallas.1} parent=0
    #allocation2 [shape = 'u8[65536]{0}', space=vmem, size = 0x10000, scoped, tag = 'input window, operand 2, single buffered']
    #allocation3 [shape = 's32[1]{0}', space=sflag, size = 0x4, scoped, tag = 'scoped memory for _bigram_loss_pallas.1']
    #allocation4 [shape = 's32[1]{0}', space=sflag, size = 0x4, scoped, tag = 'scoped memory for _bigram_loss_pallas.1']
    #allocation5 [shape = 'u8[8192]{0}', space=vmem, size = 0x2000, scoped, tag = 'output window, operand 0, single buffered']
    %10 = vsyncpa [#allocation3], 0
    %11 = vsyncpa [#allocation4], 0
    // Predicated region
    $region2: #{_bigram_loss_pallas.1} parent=1 // pred_check
      _
    $region3: #{_bigram_loss_pallas.1} parent=1 // pred_check_branch
      %13 = sbr.rel (0) target = $region5
    $region4: #{_bigram_loss_pallas.1} parent=1 // pred_region
      _
    $region5: #{_bigram_loss_pallas.1} parent=1 // pred_fallthru
      _
    // Predicated region
    $region6: #{_bigram_loss_pallas.1} parent=1 // pred_check
      _
    $region7: #{_bigram_loss_pallas.1} parent=1 // pred_check_branch
      %15 = sbr.rel (0) target = $region9
    $region8: #{_bigram_loss_pallas.1} parent=1 // pred_region
      _
    $region9: #{_bigram_loss_pallas.1} parent=1 // pred_fallthru
      _
    // Predicated region
    $region10: #{_bigram_loss_pallas.1} parent=1 // pred_check
      _
    $region11: #{_bigram_loss_pallas.1} parent=1 // pred_check_branch
      %17 = sbr.rel (0) target = $region13
    $region12: #{_bigram_loss_pallas.1} parent=1 // pred_region
      %s19 = ssub.s32 2048, 2048
      %20 = vsyncadd [#allocation3], %s19
      %s21 = sshll.u32 [#allocation2], 4
      %s22 = int_to_ptr.vmem [resolvable:$true] %s21
      %27 = dma.hbm_to_vmem [thread:$0]  %s2, 2048, %s22, [#allocation3], 128, 128, 8
    $region13: #{_bigram_loss_pallas.1} parent=1 // pred_fallthru
      _
    // Predicated region
    $region14: #{_bigram_loss_pallas.1} parent=1 // pred_check
      _
    $region15: #{_bigram_loss_pallas.1} parent=1 // pred_check_branch
      %29 = sbr.rel (0) target = $region17
    $region16: #{_bigram_loss_pallas.1} parent=1 // pred_region
      %30 = dma.done [#allocation3], 2048
    $region17: #{_bigram_loss_pallas.1} parent=1 // pred_fallthru
      _
    %s31 = smul.u32 0, 16
    %v32 = vld [vmem:[%s0] sm:$0xff]
    %v33 = vld [vmem:[%s0 + $0x8] sm:$0xff]
    %v34 = vlaneseq
    %v35 = vand.u32 %v34, 127
    %36 = vset.pattern.permute.xlu0 0
    %37 = vperm.xlu0 %36, %v32
    %v38 = vpop.permute.xlu0 %37
    %39 = vset.pattern.permute.xlu0 0
    %40 = vperm.xlu0 %39, %v33
    %v41 = vpop.permute.xlu0 %40
    %vm42 = vcmp.eq.s32.totalorder %v35, %v38
    %vm43 = vcmp.eq.s32.totalorder %v35, %v41
    %v44 = vsel %vm42, 1, 0
    %v45 = vsel %vm43, 1, 0
    %v46 = vcvt.s32.f32 %v44
    %v47 = vcvt.s32.f32 %v45
    %v48 = vld [vmem:[#allocation2] sm:$0xff]
    %v49 = vld [vmem:[#allocation2 + $0x8] sm:$0xff]
    %v50 = vld [vmem:[#allocation2 + $0x10] sm:$0xff]
    %v51 = vld [vmem:[#allocation2 + $0x18] sm:$0xff]
    %v52 = vld [vmem:[#allocation2 + $0x20] sm:$0xff]
    %v53 = vld [vmem:[#allocation2 + $0x28] sm:$0xff]
    %v54 = vld [vmem:[#allocation2 + $0x30] sm:$0xff]
    %v55 = vld [vmem:[#allocation2 + $0x38] sm:$0xff]
    %v56 = vld [vmem:[#allocation2 + $0x40] sm:$0xff]
    %v57 = vld [vmem:[#allocation2 + $0x48] sm:$0xff]
    %v58 = vld [vmem:[#allocation2 + $0x50] sm:$0xff]
    %v59 = vld [vmem:[#allocation2 + $0x58] sm:$0xff]
    %v60 = vld [vmem:[#allocation2 + $0x60] sm:$0xff]
    %v61 = vld [vmem:[#allocation2 + $0x68] sm:$0xff]
    %v62 = vld [vmem:[#allocation2 + $0x70] sm:$0xff]
    %v63 = vld [vmem:[#allocation2 + $0x78] sm:$0xff]
    %64 = vmatprep.subr.mxu0 0.0
    %65 = vmatpush1.msra.mxu0 %v48
    %66 = vmatprep.subr.mxu0 0.0
    %67 = vmatpush1.msra.mxu0 %v49
    %68 = vmatprep.subr.mxu0 0.0
    %69 = vmatpush1.msra.mxu0 %v50
    %70 = vmatprep.subr.mxu0 0.0
    %71 = vmatpush1.msra.mxu0 %v51
    %72 = vmatprep.subr.mxu0 0.0
    %73 = vmatpush1.msra.mxu0 %v52
    %74 = vmatprep.subr.mxu0 0.0
    %75 = vmatpush1.msra.mxu0 %v53
    %76 = vmatprep.subr.mxu0 0.0
    %77 = vmatpush1.msra.mxu0 %v54
    %78 = vmatprep.subr.mxu0 0.0
    %79 = vmatpush1.msra.mxu0 %v55
    %80 = vmatprep.subr.mxu0 0.0
    %81 = vmatpush1.msra.mxu0 %v56
    %82 = vmatprep.subr.mxu0 0.0
    %83 = vmatpush1.msra.mxu0 %v57
    %84 = vmatprep.subr.mxu0 0.0
    %85 = vmatpush1.msra.mxu0 %v58
    %86 = vmatprep.subr.mxu0 0.0
    %87 = vmatpush1.msra.mxu0 %v59
    %88 = vmatprep.subr.mxu0 0.0
    %89 = vmatpush1.msra.mxu0 %v60
    %90 = vmatprep.subr.mxu0 0.0
    %91 = vmatpush1.msra.mxu0 %v61
    %92 = vmatprep.subr.mxu0 0.0
    %93 = vmatpush1.msra.mxu0 %v62
    %94 = vmatprep.subr.mxu0 0.0
    %95 = vmatpush1.msra.mxu0 %v63
    %96 = vmatprep.subr.mxu0 0.0
    %97 = vmatpush1.msra.mxu0 0.0
    %98 = vmatprep.subr.mxu0 0.0
    %99 = vmatpush1.msra.mxu0 0.0
    %100 = vmatprep.subr.mxu0 0.0
    %101 = vmatpush1.msra.mxu0 0.0
    %102 = vmatprep.subr.mxu0 0.0
    %103 = vmatpush1.msra.mxu0 0.0
    %104 = vmatprep.subr.mxu0 0.0
    %105 = vmatpush1.msra.mxu0 0.0
    %106 = vmatprep.subr.mxu0 0.0
    %107 = vmatpush1.msra.mxu0 0.0
    %108 = vmatprep.subr.mxu0 0.0
    %109 = vmatpush1.msra.mxu0 0.0
    %110 = vmatprep.subr.mxu0 0.0
    %111 = vmatpush1.msra.mxu0 0.0
    %112 = vmatprep.subr.mxu0 0.0
    %113 = vmatpush1.msra.mxu0 0.0
    %114 = vmatprep.subr.mxu0 0.0
    %115 = vmatpush1.msra.mxu0 0.0
    %116 = vmatprep.subr.mxu0 0.0
    %117 = vmatpush1.msra.mxu0 0.0
    %118 = vmatprep.subr.mxu0 0.0
    %119 = vmatpush1.msra.mxu0 0.0
    %120 = vmatprep.subr.mxu0 0.0
    %121 = vmatpush1.msra.mxu0 0.0
    %122 = vmatprep.subr.mxu0 0.0
    %123 = vmatpush1.msra.mxu0 0.0
    %124 = vmatprep.subr.mxu0 0.0
    %125 = vmatpush1.msra.mxu0 0.0
    %126 = vmatprep.subr.mxu0 0.0
    %127 = vmatpush1.msra.mxu0 0.0
    %128 = vmatprep.mubr.f32.mxu0 0.0
    %129 = vmatmul.mubr.f32.gmra.mrb[0].mxu0 %v46
    %v130 = vpop.f32.mrb[0].mxu0
    %v131 = vadd.f32 0.0, %v130
    %v132 = vpop.f32.mrb[0].mxu0
    %133 = vmatprep.mubr.f32.mxu0 0.0
    %134 = vmatmul.mubr.f32.gmra.mrb[0].mxu0 %v47
    %v135 = vpop.f32.mrb[0].mxu0
    %v136 = vadd.f32 0.0, %v135
    %v137 = vpop.f32.mrb[0].mxu0
    %138 = vdwg.mxu0
    %139 = vst [vmem:[#allocation5] sm:$0xff] %v131
    %140 = vst [vmem:[#allocation5 + $0x8] sm:$0xff] %v136
    %vm141 = vcmp.lt.s32.totalorder %v35, 64
    %v142 = vsel %vm141, %v131, -inf
    %v143 = vsel %vm141, %v136, -inf
    %144 = vmax.xlane.f32.xlu0 %v142
    %v145 = vpop.xlane.xlu0 %144
    %146 = vmax.xlane.f32.xlu0 %v143
    %v147 = vpop.xlane.xlu0 %146
    %v148 = vsub.f32 %v142, %v145
    %v149 = vsub.f32 %v143, %v147
    %v150 = vmul.f32 %v148, 1.442695
    %v151 = vpow.pop %v150
    %v152 = vmul.f32 %v149, 1.442695
    %v153 = vpow.pop %v152
    %154 = vadd.xlane.f32.xlu0 %v151
    %v155 = vpop.xlane.xlu0 %154
    %156 = vadd.xlane.f32.xlu0 %v153
    %v157 = vpop.xlane.xlu0 %156
    %v158 = vlog2.pop %v155
    %v159 = vmul.f32 %v158, 0.6931472
    %v160 = vlog2.pop %v157
    %v161 = vmul.f32 %v160, 0.6931472
    %v162 = vadd.f32 %v145, %v159
    %v163 = vadd.f32 %v147, %v161
    %v164 = vld [vmem:[%s1] sm:$0xff]
    %v165 = vld [vmem:[%s1 + $0x8] sm:$0xff]
    %166 = vset.pattern.permute.xlu0 0
    %167 = vperm.xlu0 %166, %v164
    %v168 = vpop.permute.xlu0 %167
    %169 = vset.pattern.permute.xlu0 0
    %170 = vperm.xlu0 %169, %v165
    %v171 = vpop.permute.xlu0 %170
    %vm172 = vcmp.eq.s32.totalorder %v35, %v168
    %vm173 = vcmp.eq.s32.totalorder %v35, %v171
    %v174 = vsel %vm172, %v131, 0.0
    %v175 = vsel %vm173, %v136, 0.0
    %176 = vadd.xlane.f32.xlu0 %v174
    %v177 = vpop.xlane.xlu0 %176
    %178 = vadd.xlane.f32.xlu0 %v175
    %v179 = vpop.xlane.xlu0 %178
    %v180 = vsub.f32 %v162, %v177
    %v181 = vsub.f32 %v163, %v179
    %v182 = vlaneseq
    %v183 = vshrl.u32 %v182, 7
    %v184 = vadd.s32 %v183, 8
    %v185 = vstv %s31
    %v186 = vadd.s32 %v185, %v183
    %v187 = vadd.s32 %v185, %v184
    %vm188 = vcmp.lt.s32.totalorder %v186, 16
    %vm189 = vcmp.lt.s32.totalorder %v187, 16
    %v190 = vsel %vm188, %v180, 0.0
    %v191 = vsel %vm189, %v181, 0.0
    %vm192 = vcmask 7168
    %v193 = vsel %vm192, %v190, 0.0
    %v194 = vsel %vm192, %v191, 0.0
    %v195 = vadd.f32 %v193, %v194
    %196 = vadd.xlane.f32.xlu0 %v195
    %v197 = vpop.xlane.xlu0 %196
    %v198 = vrot.slane %v197, 4
    %v199 = vadd.f32 %v197, %v198
    %v200 = vrot.slane %v199, 2
    %v201 = vadd.f32 %v199, %v200
    %v202 = vrot.slane %v201, 1
    %v203 = vadd.f32 %v201, %v202
    %s204 = vtos %v203
    %v205 = vstv %s204
    %206 = vst [vmem:[%s4] sm:$0xff] %v205
    // Predicated region
    $region18: #{_bigram_loss_pallas.1} parent=1 // pred_check
      _
    $region19: #{_bigram_loss_pallas.1} parent=1 // pred_check_branch
      %208 = sbr.rel (0) target = $region21
    $region20: #{_bigram_loss_pallas.1} parent=1 // pred_region
      %s210 = ssub.s32 256, 256
      %211 = vsyncadd [#allocation4], %s210
      %s212 = sshll.u32 [#allocation5], 4
      %s213 = int_to_ptr.vmem [resolvable:$true] %s212
      %218 = dma.vmem_to_hbm [thread:$0]  %s213, 256, %s3, [#allocation4], 128, 128, 8
    $region21: #{_bigram_loss_pallas.1} parent=1 // pred_fallthru
      _
    // Predicated region
    $region22: #{_bigram_loss_pallas.1} parent=1 // pred_check
      _
    $region23: #{_bigram_loss_pallas.1} parent=1 // pred_check_branch
      %220 = sbr.rel (0) target = $region25
    $region24: #{_bigram_loss_pallas.1} parent=1 // pred_region
      _
    $region25: #{_bigram_loss_pallas.1} parent=1 // pred_fallthru
      _
    // Predicated region
    $region26: #{_bigram_loss_pallas.1} parent=1 // pred_check
      _
    $region27: #{_bigram_loss_pallas.1} parent=1 // pred_check_branch
      %222 = sbr.rel (0) target = $region29
    $region28: #{_bigram_loss_pallas.1} parent=1 // pred_region
      %223 = dma.done [#allocation4], 256
    $region29: #{_bigram_loss_pallas.1} parent=1 // pred_fallthru
      _
    // Predicated region
    $region30: #{_bigram_loss_pallas.1} parent=1 // pred_check
      _
    $region31: #{_bigram_loss_pallas.1} parent=1 // pred_check_branch
      %225 = sbr.rel (0) target = $region33
    $region32: #{_bigram_loss_pallas.1} parent=1 // pred_region
      _
    $region33: #{_bigram_loss_pallas.1} parent=1 // pred_fallthru
      _
    %226 = vsyncpa [#allocation3], 1
    %227 = vsyncpa [#allocation4], 1

</llo_original>
